<compile_context>
chip_gen: v7x
topology: tpu7x:2x2x1
jax: 0.10.0
libtpu: 0.0.40
codegen_flags: <defaults>
</compile_context>

<pallas_src>
import numpy as np
import jax
import jax.numpy as jnp
from jax.experimental import pallas as pl
from jax.experimental.pallas import tpu as pltpu

# ---- module constants (from the PyTorch script) ----
d_model = 768
maxlen = 30
n_segments = 2
vocab_size = 4          # len({'[PAD]','[CLS]','[SEP]','[MASK]'})
LN_EPS = 1e-5           # nn.LayerNorm default


def bert_embedding_kernel(tokid_ref, segid_ref, tok_ref, seg_ref, pos_ref,
                          gamma_ref, beta_ref, out_ref):
    """VPU select-gather + add + fused one-pass LayerNorm on a (bt, L, D) block."""
    tok_ids = tokid_ref[...]                 # (bt, L, 1) int32
    seg_ids = segid_ref[...]                 # (bt, L, 1) int32

    # Token "gather": nested select chain over the 4-row table (VPU only, no
    # MXU, no one-hot, no mask multiplies).
    # NOTE: assumes ids in [0, vocab_size) — same contract as nn.Embedding
    # (which errors on out-of-range); ids >= vocab_size fall through to the
    # last row here.
    V = tok_ref.shape[0]
    tok_e = tok_ref[V - 1:V, :]              # (1, D)
    for v in range(V - 2, -1, -1):
        tok_e = jnp.where(tok_ids == v, tok_ref[v:v + 1, :], tok_e)

    # Segment "gather": single select between the 2 rows.
    seg_e = jnp.where(seg_ids == 0, seg_ref[0:1, :], seg_ref[1:2, :])

    e = pos_ref[...] + tok_e + seg_e         # (bt, L, D) f32

    # One-pass LayerNorm over D: sum and sum-of-squares in the same sweep
    # (E[x^2] - mean^2; fine for O(1) values at D=768). rsqrt -> EUP slot.
    D = e.shape[-1]
    inv_d = 1.0 / D
    s = jnp.sum(e, axis=-1, keepdims=True)
    ss = jnp.sum(e * e, axis=-1, keepdims=True)
    mean = s * inv_d
    var = ss * inv_d - mean * mean
    inv = jax.lax.rsqrt(var + LN_EPS)
    out_ref[...] = (e - mean) * inv * gamma_ref[...] + beta_ref[...]


def bert_embedding(x, seq, tok_table, seg_table, pos_embed, gamma, beta,
                   *, batch_tile=None):
    """LayerNorm(tok_embed(x) + pos_embed + seg_embed(seq)) as a Pallas kernel."""
    B, L = x.shape
    V, D = tok_table.shape
    if batch_tile is None:
        batch_tile = B                       # toy sizes: one grid step total
    bt = batch_tile
    grid = (pl.cdiv(B, bt),)

    # Ids go in as (B, L, 1) so the compare/select broadcasts stay in
    # (rows, 768) layout with no reshapes inside the kernel.
    tok_ids = x.reshape(B, L, 1).astype(jnp.int32)
    seg_ids = seq.reshape(B, L, 1).astype(jnp.int32)

    # TODO(synk): for a real ~30K-row vocab table (~94 MiB f32, > v7x VMEM)
    # keep tok_table in HBM (pl.BlockSpec(memory_space=pl.ANY)) and gather
    # rows via scalar-prefetched ids + manual double-buffered row DMA; the
    # 4-row toy table fits VMEM trivially so it is passed whole here.
    out = pl.pallas_call(
        bert_embedding_kernel,
        out_shape=jax.ShapeDtypeStruct((B, L, D), jnp.float32),
        grid=grid,
        in_specs=[
            pl.BlockSpec((bt, L, 1), lambda b: (b, 0, 0)),       # token ids
            pl.BlockSpec((bt, L, 1), lambda b: (b, 0, 0)),       # segment ids
            pl.BlockSpec((V, D), lambda b: (0, 0)),              # tok table (whole, fetched once)
            pl.BlockSpec(seg_table.shape, lambda b: (0, 0)),     # seg table (whole, fetched once)
            pl.BlockSpec(pos_embed.shape, lambda b: (0, 0)),     # pos table (whole, fetched once)
            pl.BlockSpec(gamma.shape, lambda b: (0, 0)),         # (1, D)
            pl.BlockSpec(beta.shape, lambda b: (0, 0)),          # (1, D)
        ],
        out_specs=pl.BlockSpec((bt, L, D), lambda b: (b, 0, 0)),
        # Single TC serial loop over batch tiles; for large B*L on v7x switch
        # this axis to pltpu.CORE_PARALLEL to split across the 2 TensorCores.
        compiler_params=pltpu.CompilerParams(
            dimension_semantics=("arbitrary",)),
    )(tok_ids, seg_ids, tok_table, seg_table, pos_embed, gamma, beta)

    return out


def make_pos_embed():
    """Sinusoidal table exactly as the PyTorch __init__ builds it."""
    pos = np.arange(maxlen, dtype=np.float64)[:, None]
    i = np.arange(d_model, dtype=np.float64)[None, :]
    angle = pos / np.power(10000.0, (i // 2 * 2.0) / d_model)
    pe = np.zeros((maxlen, d_model), dtype=np.float64)
    pe[:, 0::2] = np.sin(angle[:, 0::2])
    pe[:, 1::2] = np.cos(angle[:, 1::2])
    return jnp.asarray(pe, dtype=jnp.float32)


def reference(x, seq, tok_table, seg_table, pos_embed, gamma, beta):
    e = tok_table[x] + pos_embed[None, :, :] + seg_table[seq]
    m = e.mean(-1, keepdims=True)
    v = ((e - m) ** 2).mean(-1, keepdims=True)
    return (e - m) / jnp.sqrt(v + LN_EPS) * gamma[0] + beta[0]


# TODO(synk): the rest of BERT.forward (6 encoder layers, pooler, MLM/NSP
# heads) is not kernelized here; for real throughput this embedding kernel
# should be fused into the first encoder layer's QKV projection rather than
# shipped standalone. If the downstream encoder runs bf16 (v6e/v7x), change
# out_shape dtype to bfloat16 and cast at the final store (keep LN stats f32).

if __name__ == "__main__":
    key = jax.random.PRNGKey(0)
    k_tok, k_seg, k_x, k_s = jax.random.split(key, 4)

    B = 2
    L = maxlen  # forward's `+ pos_embed` broadcast implies seq_len == maxlen

    # Parameters (deterministic init; nn.Embedding ~ N(0,1), LayerNorm gamma=1, beta=0)
    tok_table = jax.random.normal(k_tok, (vocab_size, d_model), dtype=jnp.float32)
    seg_table = jax.random.normal(k_seg, (n_segments, d_model), dtype=jnp.float32)
    pos_embed = make_pos_embed()
    gamma = jnp.ones((1, d_model), dtype=jnp.float32)
    beta = jnp.zeros((1, d_model), dtype=jnp.float32)

    # Inputs
    x = jax.random.randint(k_x, (B, L), 0, vocab_size, dtype=jnp.int32)
    seq = jax.random.randint(k_s, (B, L), 0, n_segments, dtype=jnp.int32)

    out = bert_embedding(x, seq, tok_table, seg_table, pos_embed, gamma, beta)
    out = jax.block_until_ready(out)

    ref = reference(x, seq, tok_table, seg_table, pos_embed, gamma, beta)
    assert out.shape == (B, L, d_model)
    assert jnp.allclose(out, ref, atol=1e-4, rtol=1e-4), \
        float(jnp.max(jnp.abs(out - ref)))

    print("KERNEL_OK")
</pallas_src>

<mosaic_0001>
module attributes {stable_mosaic.version = 11 : i64} {
  func.func @bert_embedding_kernel(%arg0: i32, %arg1: memref<2x30x1xi32, #tpu.memory_space<vmem>>, %arg2: memref<2x30x1xi32, #tpu.memory_space<vmem>>, %arg3: memref<4x768xf32, #tpu.memory_space<vmem>>, %arg4: memref<2x768xf32, #tpu.memory_space<vmem>>, %arg5: memref<30x768xf32, #tpu.memory_space<vmem>>, %arg6: memref<1x768xf32, #tpu.memory_space<vmem>>, %arg7: memref<1x768xf32, #tpu.memory_space<vmem>>, %arg8: memref<2x30x768xf32, #tpu.memory_space<vmem>>) attributes {dimension_semantics = [#tpu.dimension_semantics<arbitrary>], iteration_bounds = array<i64: 1>, scalar_prefetch = 0 : i64, scratch_operands = 0 : i64, tpu.core_type = #tpu.core_type<tc>, window_params = [{transform_indices = @transform_0, window_bounds = array<i64: 2, 30, 1>}, {transform_indices = @transform_1, window_bounds = array<i64: 2, 30, 1>}, {pipeline_mode = #tpu.pipeline_mode<synchronous>, transform_indices = @transform_2, window_bounds = array<i64: 4, 768>}, {pipeline_mode = #tpu.pipeline_mode<synchronous>, transform_indices = @transform_3, window_bounds = array<i64: 2, 768>}, {pipeline_mode = #tpu.pipeline_mode<synchronous>, transform_indices = @transform_4, window_bounds = array<i64: 30, 768>}, {pipeline_mode = #tpu.pipeline_mode<synchronous>, transform_indices = @transform_5, window_bounds = array<i64: 1, 768>}, {pipeline_mode = #tpu.pipeline_mode<synchronous>, transform_indices = @transform_6, window_bounds = array<i64: 1, 768>}, {transform_indices = @transform_7, window_bounds = array<i64: 2, 30, 768>}]} {
    %c0 = arith.constant 0 : index
    %c0_0 = arith.constant 0 : index
    %c0_1 = arith.constant 0 : index
    %0 = vector.load %arg1[%c0, %c0_0, %c0_1] : memref<2x30x1xi32, #tpu.memory_space<vmem>>, vector<2x30x1xi32>
    %c0_2 = arith.constant 0 : index
    %c0_3 = arith.constant 0 : index
    %c0_4 = arith.constant 0 : index
    %1 = vector.load %arg2[%c0_2, %c0_3, %c0_4] : memref<2x30x1xi32, #tpu.memory_space<vmem>>, vector<2x30x1xi32>
    %c3 = arith.constant 3 : index
    %c0_5 = arith.constant 0 : index
    %2 = vector.load %arg3[%c3, %c0_5] : memref<4x768xf32, #tpu.memory_space<vmem>>, vector<1x768xf32>
    %c2_i32 = arith.constant 2 : i32
    %3 = vector.broadcast %c2_i32 : i32 to vector<2x30x1xi32>
    %4 = arith.cmpi eq, %0, %3 : vector<2x30x1xi32>
    %c2 = arith.constant 2 : index
    %c0_6 = arith.constant 0 : index
    %5 = vector.load %arg3[%c2, %c0_6] : memref<4x768xf32, #tpu.memory_space<vmem>>, vector<1x768xf32>
    %6 = vector.shape_cast %4 : vector<2x30x1xi1> to vector<2x30x1xi1>
    %7 = vector.broadcast %6 : vector<2x30x1xi1> to vector<2x30x768xi1>
    %8 = vector.shape_cast %5 : vector<1x768xf32> to vector<1x1x768xf32>
    %9 = vector.broadcast %8 : vector<1x1x768xf32> to vector<2x30x768xf32>
    %10 = vector.shape_cast %2 : vector<1x768xf32> to vector<1x1x768xf32>
    %11 = vector.broadcast %10 : vector<1x1x768xf32> to vector<2x30x768xf32>
    %12 = arith.select %7, %9, %11 : vector<2x30x768xi1>, vector<2x30x768xf32>
    %c1_i32 = arith.constant 1 : i32
    %13 = vector.broadcast %c1_i32 : i32 to vector<2x30x1xi32>
    %14 = arith.cmpi eq, %0, %13 : vector<2x30x1xi32>
    %c1 = arith.constant 1 : index
    %c0_7 = arith.constant 0 : index
    %15 = vector.load %arg3[%c1, %c0_7] : memref<4x768xf32, #tpu.memory_space<vmem>>, vector<1x768xf32>
    %16 = vector.shape_cast %14 : vector<2x30x1xi1> to vector<2x30x1xi1>
    %17 = vector.broadcast %16 : vector<2x30x1xi1> to vector<2x30x768xi1>
    %18 = vector.shape_cast %15 : vector<1x768xf32> to vector<1x1x768xf32>
    %19 = vector.broadcast %18 : vector<1x1x768xf32> to vector<2x30x768xf32>
    %20 = arith.select %17, %19, %12 : vector<2x30x768xi1>, vector<2x30x768xf32>
    %c0_i32 = arith.constant 0 : i32
    %21 = vector.broadcast %c0_i32 : i32 to vector<2x30x1xi32>
    %22 = arith.cmpi eq, %0, %21 : vector<2x30x1xi32>
    %c0_8 = arith.constant 0 : index
    %c0_9 = arith.constant 0 : index
    %23 = vector.load %arg3[%c0_8, %c0_9] : memref<4x768xf32, #tpu.memory_space<vmem>>, vector<1x768xf32>
    %24 = vector.shape_cast %22 : vector<2x30x1xi1> to vector<2x30x1xi1>
    %25 = vector.broadcast %24 : vector<2x30x1xi1> to vector<2x30x768xi1>
    %26 = vector.shape_cast %23 : vector<1x768xf32> to vector<1x1x768xf32>
    %27 = vector.broadcast %26 : vector<1x1x768xf32> to vector<2x30x768xf32>
    %28 = arith.select %25, %27, %20 : vector<2x30x768xi1>, vector<2x30x768xf32>
    %c0_i32_10 = arith.constant 0 : i32
    %29 = vector.broadcast %c0_i32_10 : i32 to vector<2x30x1xi32>
    %30 = arith.cmpi eq, %1, %29 : vector<2x30x1xi32>
    %c0_11 = arith.constant 0 : index
    %c0_12 = arith.constant 0 : index
    %31 = vector.load %arg4[%c0_11, %c0_12] : memref<2x768xf32, #tpu.memory_space<vmem>>, vector<1x768xf32>
    %c1_13 = arith.constant 1 : index
    %c0_14 = arith.constant 0 : index
    %32 = vector.load %arg4[%c1_13, %c0_14] : memref<2x768xf32, #tpu.memory_space<vmem>>, vector<1x768xf32>
    %33 = vector.shape_cast %30 : vector<2x30x1xi1> to vector<2x30x1xi1>
    %34 = vector.broadcast %33 : vector<2x30x1xi1> to vector<2x30x768xi1>
    %35 = vector.shape_cast %31 : vector<1x768xf32> to vector<1x1x768xf32>
    %36 = vector.broadcast %35 : vector<1x1x768xf32> to vector<2x30x768xf32>
    %37 = vector.shape_cast %32 : vector<1x768xf32> to vector<1x1x768xf32>
    %38 = vector.broadcast %37 : vector<1x1x768xf32> to vector<2x30x768xf32>
    %39 = arith.select %34, %36, %38 : vector<2x30x768xi1>, vector<2x30x768xf32>
    %c0_15 = arith.constant 0 : index
    %c0_16 = arith.constant 0 : index
    %40 = vector.load %arg5[%c0_15, %c0_16] : memref<30x768xf32, #tpu.memory_space<vmem>>, vector<30x768xf32>
    %41 = vector.shape_cast %40 : vector<30x768xf32> to vector<1x30x768xf32>
    %42 = vector.broadcast %41 : vector<1x30x768xf32> to vector<2x30x768xf32>
    %43 = arith.addf %42, %28 : vector<2x30x768xf32>
    %44 = arith.addf %43, %39 : vector<2x30x768xf32>
    %cst = arith.constant dense<0.000000e+00> : vector<2x30xf32>
    %45 = vector.multi_reduction <add>, %44, %cst [2] : vector<2x30x768xf32> to vector<2x30xf32>
    %46 = vector.shape_cast %45 : vector<2x30xf32> to vector<2x30x1xf32>
    %47 = arith.mulf %44, %44 : vector<2x30x768xf32>
    %cst_17 = arith.constant dense<0.000000e+00> : vector<2x30xf32>
    %48 = vector.multi_reduction <add>, %47, %cst_17 [2] : vector<2x30x768xf32> to vector<2x30xf32>
    %49 = vector.shape_cast %48 : vector<2x30xf32> to vector<2x30x1xf32>
    %cst_18 = arith.constant 0.00130208337 : f32
    %50 = vector.broadcast %cst_18 : f32 to vector<2x30x1xf32>
    %51 = arith.mulf %46, %50 : vector<2x30x1xf32>
    %cst_19 = arith.constant 0.00130208337 : f32
    %52 = vector.broadcast %cst_19 : f32 to vector<2x30x1xf32>
    %53 = arith.mulf %49, %52 : vector<2x30x1xf32>
    %54 = arith.mulf %51, %51 : vector<2x30x1xf32>
    %55 = arith.subf %53, %54 : vector<2x30x1xf32>
    %cst_20 = arith.constant 9.99999974E-6 : f32
    %56 = vector.broadcast %cst_20 : f32 to vector<2x30x1xf32>
    %57 = arith.addf %55, %56 : vector<2x30x1xf32>
    %58 = math.rsqrt %57 : vector<2x30x1xf32>
    %59 = vector.broadcast %51 : vector<2x30x1xf32> to vector<2x30x768xf32>
    %60 = arith.subf %44, %59 : vector<2x30x768xf32>
    %61 = vector.broadcast %58 : vector<2x30x1xf32> to vector<2x30x768xf32>
    %62 = arith.mulf %60, %61 : vector<2x30x768xf32>
    %c0_21 = arith.constant 0 : index
    %c0_22 = arith.constant 0 : index
    %63 = vector.load %arg6[%c0_21, %c0_22] : memref<1x768xf32, #tpu.memory_space<vmem>>, vector<1x768xf32>
    %64 = vector.shape_cast %63 : vector<1x768xf32> to vector<1x1x768xf32>
    %65 = vector.broadcast %64 : vector<1x1x768xf32> to vector<2x30x768xf32>
    %66 = arith.mulf %62, %65 : vector<2x30x768xf32>
    %c0_23 = arith.constant 0 : index
    %c0_24 = arith.constant 0 : index
    %67 = vector.load %arg7[%c0_23, %c0_24] : memref<1x768xf32, #tpu.memory_space<vmem>>, vector<1x768xf32>
    %68 = vector.shape_cast %67 : vector<1x768xf32> to vector<1x1x768xf32>
    %69 = vector.broadcast %68 : vector<1x1x768xf32> to vector<2x30x768xf32>
    %70 = arith.addf %66, %69 : vector<2x30x768xf32>
    %c0_25 = arith.constant 0 : index
    %c0_26 = arith.constant 0 : index
    %c0_27 = arith.constant 0 : index
    %71 = vector.load %arg8[%c0_25, %c0_26, %c0_27] : memref<2x30x768xf32, #tpu.memory_space<vmem>>, vector<2x30x768xf32>
    tpu.vector_store %arg8[%c0_25, %c0_26, %c0_27], %70 {strides = array<i32>} : memref<2x30x768xf32, #tpu.memory_space<vmem>>, vector<2x30x768xf32>,
    return
  }
  func.func @transform_0(%arg0: i32) -> (i32, i32, i32) {
    %c0_i32 = arith.constant 0 : i32
    %c0_i32_0 = arith.constant 0 : i32
    %c0_i32_1 = arith.constant 0 : i32
    return %arg0, %c0_i32, %c0_i32_0 : i32, i32, i32
  }
  func.func @transform_1(%arg0: i32) -> (i32, i32, i32) {
    %c0_i32 = arith.constant 0 : i32
    %c0_i32_0 = arith.constant 0 : i32
    %c0_i32_1 = arith.constant 0 : i32
    return %arg0, %c0_i32, %c0_i32_0 : i32, i32, i32
  }
  func.func @transform_2(%arg0: i32) -> (i32, i32) {
    %c0_i32 = arith.constant 0 : i32
    %c0_i32_0 = arith.constant 0 : i32
    %c0_i32_1 = arith.constant 0 : i32
    return %c0_i32, %c0_i32_0 : i32, i32
  }
  func.func @transform_3(%arg0: i32) -> (i32, i32) {
    %c0_i32 = arith.constant 0 : i32
    %c0_i32_0 = arith.constant 0 : i32
    %c0_i32_1 = arith.constant 0 : i32
    return %c0_i32, %c0_i32_0 : i32, i32
  }
  func.func @transform_4(%arg0: i32) -> (i32, i32) {
    %c0_i32 = arith.constant 0 : i32
    %c0_i32_0 = arith.constant 0 : i32
    %c0_i32_1 = arith.constant 0 : i32
    return %c0_i32, %c0_i32_0 : i32, i32
  }
  func.func @transform_5(%arg0: i32) -> (i32, i32) {
    %c0_i32 = arith.constant 0 : i32
    %c0_i32_0 = arith.constant 0 : i32
    %c0_i32_1 = arith.constant 0 : i32
    return %c0_i32, %c0_i32_0 : i32, i32
  }
  func.func @transform_6(%arg0: i32) -> (i32, i32) {
    %c0_i32 = arith.constant 0 : i32
    %c0_i32_0 = arith.constant 0 : i32
    %c0_i32_1 = arith.constant 0 : i32
    return %c0_i32, %c0_i32_0 : i32, i32
  }
  func.func @transform_7(%arg0: i32) -> (i32, i32, i32) {
    %c0_i32 = arith.constant 0 : i32
    %c0_i32_0 = arith.constant 0 : i32
    %c0_i32_1 = arith.constant 0 : i32
    return %arg0, %c0_i32, %c0_i32_0 : i32, i32, i32
  }
}

</mosaic_0001>

<llo_original>
// kernel: tpu_custom_call.1
$region0: #{tpu_custom_call.1}
  #allocation0 [shape = 'u32[]', space=smem, size = 0x4, offset = 0x4, fixed_abs, tag = 'smem constant byte address 0x4 - core index']
  #allocation1 [shape = 'u32[144,128]{1,0:T(1,128)}', space=vmem, size = 0x12000, scoped, tag = 'internal scratch']
  %s0 = inlined_call_operand.vmem [shape: s32[2,30,1], index: 0, kind: input, shape index: {}]
  %s1 = inlined_call_operand.vmem [shape: s32[2,30,1], index: 1, kind: input, shape index: {}]
  %s2 = inlined_call_operand.vmem [shape: f32[4,768], index: 2, kind: input, shape index: {}]
  %s3 = inlined_call_operand.vmem [shape: f32[2,768], index: 3, kind: input, shape index: {}]
  %s4 = inlined_call_operand.hbm [shape: f32[30,768], index: 4, kind: input, shape index: {}]
  %s5 = inlined_call_operand.vmem [shape: f32[1,768], index: 5, kind: input, shape index: {}]
  %s6 = inlined_call_operand.vmem [shape: f32[1,768], index: 6, kind: input, shape index: {}]
  %s7 = inlined_call_operand.vmem [shape: f32[2,30,768], index: 7, kind: output, shape index: {}]
  %s8 = sld [smem:[#allocation0]]
  $region42: #{tpu_custom_call.1} parent=0
    _
  %s10 = ssub.s32 1, %s8
  %s11 = scalar_select 0, %s10, %s8
  $region1: #{tpu_custom_call.1} parent=0
    #allocation2 [shape = 'u8[98304]{0}', space=vmem, size = 0x18000, scoped, tag = 'input window, operand 4, single buffered']
    #allocation3 [shape = 's32[1]{0}', space=sflag, size = 0x4, scoped, tag = 'scoped memory for tpu_custom_call.1']
    %12 = vsyncpa [#allocation3], 0
    // Predicated region
    $region2: #{tpu_custom_call.1} parent=1 // pred_check
      _
    $region3: #{tpu_custom_call.1} parent=1 // pred_check_branch
      %14 = sbr.rel (0) target = $region5
    $region4: #{tpu_custom_call.1} parent=1 // pred_region
      _
    $region5: #{tpu_custom_call.1} parent=1 // pred_fallthru
      _
    // Predicated region
    $region6: #{tpu_custom_call.1} parent=1 // pred_check
      _
    $region7: #{tpu_custom_call.1} parent=1 // pred_check_branch
      %16 = sbr.rel (0) target = $region9
    $region8: #{tpu_custom_call.1} parent=1 // pred_region
      _
    $region9: #{tpu_custom_call.1} parent=1 // pred_fallthru
      _
    // Predicated region
    $region10: #{tpu_custom_call.1} parent=1 // pred_check
      _
    $region11: #{tpu_custom_call.1} parent=1 // pred_check_branch
      %18 = sbr.rel (0) target = $region13
    $region12: #{tpu_custom_call.1} parent=1 // pred_region
      _
    $region13: #{tpu_custom_call.1} parent=1 // pred_fallthru
      _
    // Predicated region
    $region14: #{tpu_custom_call.1} parent=1 // pred_check
      _
    $region15: #{tpu_custom_call.1} parent=1 // pred_check_branch
      %20 = sbr.rel (0) target = $region17
    $region16: #{tpu_custom_call.1} parent=1 // pred_region
      _
    $region17: #{tpu_custom_call.1} parent=1 // pred_fallthru
      _
    // Predicated region
    $region18: #{tpu_custom_call.1} parent=1 // pred_check
      _
    $region19: #{tpu_custom_call.1} parent=1 // pred_check_branch
      %22 = sbr.rel (0) target = $region21
    $region20: #{tpu_custom_call.1} parent=1 // pred_region
      %s24 = ssub.s32 3072, 3072
      %25 = vsyncadd [#allocation3], %s24
      %s26 = sshll.u32 [#allocation2], 4
      %s27 = int_to_ptr.vmem [resolvable:$true] %s26
      %32 = dma.hbm_to_vmem [thread:$0]  %s4, 3072, %s27, [#allocation3], 768, 768, 48
    $region21: #{tpu_custom_call.1} parent=1 // pred_fallthru
      _
    // Predicated region
    $region22: #{tpu_custom_call.1} parent=1 // pred_check
      _
    $region23: #{tpu_custom_call.1} parent=1 // pred_check_branch
      %34 = sbr.rel (0) target = $region25
    $region24: #{tpu_custom_call.1} parent=1 // pred_region
      _
    $region25: #{tpu_custom_call.1} parent=1 // pred_fallthru
      _
    // Predicated region
    $region26: #{tpu_custom_call.1} parent=1 // pred_check
      _
    $region27: #{tpu_custom_call.1} parent=1 // pred_check_branch
      %36 = sbr.rel (0) target = $region29
    $region28: #{tpu_custom_call.1} parent=1 // pred_region
      _
    $region29: #{tpu_custom_call.1} parent=1 // pred_fallthru
      _
    // Predicated region
    $region30: #{tpu_custom_call.1} parent=1 // pred_check
      _
    $region31: #{tpu_custom_call.1} parent=1 // pred_check_branch
      %38 = sbr.rel (0) target = $region33
    $region32: #{tpu_custom_call.1} parent=1 // pred_region
      %39 = dma.done [#allocation3], 3072
    $region33: #{tpu_custom_call.1} parent=1 // pred_fallthru
      _
    %v40 = vld [vmem:[%s0] sm:$0xff]
    %v41 = vld [vmem:[%s0 + $0x8] sm:$0xff]
    %v42 = vld [vmem:[%s0 + $0x10] sm:$0xff]
    %v43 = vld [vmem:[%s0 + $0x18] sm:$0x3f]
    %v44 = vld [vmem:[%s0 + $0x20] sm:$0xff]
    %v45 = vld [vmem:[%s0 + $0x28] sm:$0xff]
    %v46 = vld [vmem:[%s0 + $0x30] sm:$0xff]
    %v47 = vld [vmem:[%s0 + $0x38] sm:$0x3f]
    %v48 = vld [vmem:[%s1] sm:$0xff]
    %v49 = vld [vmem:[%s1 + $0x8] sm:$0xff]
    %v50 = vld [vmem:[%s1 + $0x10] sm:$0xff]
    %v51 = vld [vmem:[%s1 + $0x18] sm:$0x3f]
    %v52 = vld [vmem:[%s1 + $0x20] sm:$0xff]
    %v53 = vld [vmem:[%s1 + $0x28] sm:$0xff]
    %v54 = vld [vmem:[%s1 + $0x30] sm:$0xff]
    %v55 = vld [vmem:[%s1 + $0x38] sm:$0x3f]
    %s56 = scalar_lea.vmem %s2, 3
    %v57 = vld [vmem:[%s56] ss:$4 sm:$0x3f]
    %vm58 = vcmp.eq.s32.totalorder %v40, 2
    %vm59 = vcmp.eq.s32.totalorder %v41, 2
    %vm60 = vcmp.eq.s32.totalorder %v42, 2
    %vm61 = vcmp.eq.s32.totalorder %v43, 2
    %vm62 = vcmp.eq.s32.totalorder %v44, 2
    %vm63 = vcmp.eq.s32.totalorder %v45, 2
    %vm64 = vcmp.eq.s32.totalorder %v46, 2
    %vm65 = vcmp.eq.s32.totalorder %v47, 2
    %s66 = scalar_lea.vmem %s2, 2
    %v67 = vld [vmem:[%s66] ss:$4 sm:$0x3f]
    %v68 = vsel %vm58, 1, 0
    %v69 = vsel %vm59, 1, 0
    %v70 = vsel %vm60, 1, 0
    %v71 = vsel %vm61, 1, 0
    %v72 = vsel %vm62, 1, 0
    %v73 = vsel %vm63, 1, 0
    %v74 = vsel %vm64, 1, 0
    %v75 = vsel %vm65, 1, 0
    %76 = vset.pattern.permute.xlu0 0
    %77 = vperm.xlu0 %76, %v68
    %v78 = vpop.permute.xlu0 %77
    %79 = vset.pattern.permute.xlu0 0
    %80 = vperm.xlu0 %79, %v69
    %v81 = vpop.permute.xlu0 %80
    %82 = vset.pattern.permute.xlu0 0
    %83 = vperm.xlu0 %82, %v70
    %v84 = vpop.permute.xlu0 %83
    %85 = vset.pattern.permute.xlu0 0
    %86 = vperm.xlu0 %85, %v71
    %v87 = vpop.permute.xlu0 %86
    %88 = vset.pattern.permute.xlu0 0
    %89 = vperm.xlu0 %88, %v72
    %v90 = vpop.permute.xlu0 %89
    %91 = vset.pattern.permute.xlu0 0
    %92 = vperm.xlu0 %91, %v73
    %v93 = vpop.permute.xlu0 %92
    %94 = vset.pattern.permute.xlu0 0
    %95 = vperm.xlu0 %94, %v74
    %v96 = vpop.permute.xlu0 %95
    %97 = vset.pattern.permute.xlu0 0
    %98 = vperm.xlu0 %97, %v75
    %v99 = vpop.permute.xlu0 %98
    %vm100 = vcmp.eq.s32.totalorder %v78, 1
    %vm101 = vcmp.eq.s32.totalorder %v81, 1
    %vm102 = vcmp.eq.s32.totalorder %v84, 1
    %vm103 = vcmp.eq.s32.totalorder %v87, 1
    %vm104 = vcmp.eq.s32.totalorder %v90, 1
    %vm105 = vcmp.eq.s32.totalorder %v93, 1
    %vm106 = vcmp.eq.s32.totalorder %v96, 1
    %vm107 = vcmp.eq.s32.totalorder %v99, 1
    %v109 = vlaneseq
    %v110 = vshrl.u32 %v109, 7
    %v111 = vsub.s32 0, %v110
    %v112 = vrot.slane %v67, %v111
    %v113 = vlaneseq
    %v114 = vshrl.u32 %v113, 7
    %v115 = vsub.s32 1, %v114
    %v116 = vrot.slane %v67, %v115
    %v117 = vlaneseq
    %v118 = vshrl.u32 %v117, 7
    %v119 = vsub.s32 2, %v118
    %v120 = vrot.slane %v67, %v119
    %v121 = vlaneseq
    %v122 = vshrl.u32 %v121, 7
    %v123 = vsub.s32 3, %v122
    %v124 = vrot.slane %v67, %v123
    %v125 = vlaneseq
    %v126 = vshrl.u32 %v125, 7
    %v127 = vsub.s32 4, %v126
    %v128 = vrot.slane %v67, %v127
    %v129 = vlaneseq
    %v130 = vshrl.u32 %v129, 7
    %v131 = vsub.s32 5, %v130
    %v132 = vrot.slane %v67, %v131
    %v140 = vlaneseq
    %v141 = vshrl.u32 %v140, 7
    %v142 = vsub.s32 0, %v141
    %v143 = vrot.slane %v57, %v142
    %v144 = vlaneseq
    %v145 = vshrl.u32 %v144, 7
    %v146 = vsub.s32 1, %v145
    %v147 = vrot.slane %v57, %v146
    %v148 = vlaneseq
    %v149 = vshrl.u32 %v148, 7
    %v150 = vsub.s32 2, %v149
    %v151 = vrot.slane %v57, %v150
    %v152 = vlaneseq
    %v153 = vshrl.u32 %v152, 7
    %v154 = vsub.s32 3, %v153
    %v155 = vrot.slane %v57, %v154
    %v156 = vlaneseq
    %v157 = vshrl.u32 %v156, 7
    %v158 = vsub.s32 4, %v157
    %v159 = vrot.slane %v57, %v158
    %v160 = vlaneseq
    %v161 = vshrl.u32 %v160, 7
    %v162 = vsub.s32 5, %v161
    %v163 = vrot.slane %v57, %v162
    %v170 = vsel %vm100, %v112, %v143
    %v171 = vsel %vm100, %v116, %v147
    %v172 = vsel %vm100, %v120, %v151
    %v173 = vsel %vm100, %v124, %v155
    %v174 = vsel %vm100, %v128, %v159
    %v175 = vsel %vm100, %v132, %v163
    %v176 = vsel %vm101, %v112, %v143
    %v177 = vsel %vm101, %v116, %v147
    %v178 = vsel %vm101, %v120, %v151
    %v179 = vsel %vm101, %v124, %v155
    %v180 = vsel %vm101, %v128, %v159
    %v181 = vsel %vm101, %v132, %v163
    %v182 = vsel %vm102, %v112, %v143
    %v183 = vsel %vm102, %v116, %v147
    %v184 = vsel %vm102, %v120, %v151
    %v185 = vsel %vm102, %v124, %v155
    %v186 = vsel %vm102, %v128, %v159
    %v187 = vsel %vm102, %v132, %v163
    %v188 = vsel %vm103, %v112, %v143
    %v189 = vsel %vm103, %v116, %v147
    %v190 = vsel %vm103, %v120, %v151
    %v191 = vsel %vm103, %v124, %v155
    %v192 = vsel %vm103, %v128, %v159
    %v193 = vsel %vm103, %v132, %v163
    %v194 = vsel %vm104, %v112, %v143
    %v195 = vsel %vm104, %v116, %v147
    %v196 = vsel %vm104, %v120, %v151
    %v197 = vsel %vm104, %v124, %v155
    %v198 = vsel %vm104, %v128, %v159
    %v199 = vsel %vm104, %v132, %v163
    %v200 = vsel %vm105, %v112, %v143
    %v201 = vsel %vm105, %v116, %v147
    %v202 = vsel %vm105, %v120, %v151
    %v203 = vsel %vm105, %v124, %v155
    %v204 = vsel %vm105, %v128, %v159
    %v205 = vsel %vm105, %v132, %v163
    %v206 = vsel %vm106, %v112, %v143
    %v207 = vsel %vm106, %v116, %v147
    %v208 = vsel %vm106, %v120, %v151
    %v209 = vsel %vm106, %v124, %v155
    %v210 = vsel %vm106, %v128, %v159
    %v211 = vsel %vm106, %v132, %v163
    %v212 = vsel %vm107, %v112, %v143
    %v213 = vsel %vm107, %v116, %v147
    %v214 = vsel %vm107, %v120, %v151
    %v215 = vsel %vm107, %v124, %v155
    %v216 = vsel %vm107, %v128, %v159
    %v217 = vsel %vm107, %v132, %v163
    %vm218 = vcmp.eq.s32.totalorder %v40, 1
    %vm219 = vcmp.eq.s32.totalorder %v41, 1
    %vm220 = vcmp.eq.s32.totalorder %v42, 1
    %vm221 = vcmp.eq.s32.totalorder %v43, 1
    %vm222 = vcmp.eq.s32.totalorder %v44, 1
    %vm223 = vcmp.eq.s32.totalorder %v45, 1
    %vm224 = vcmp.eq.s32.totalorder %v46, 1
    %vm225 = vcmp.eq.s32.totalorder %v47, 1
    %s226 = scalar_lea.vmem %s2, 1
    %v227 = vld [vmem:[%s226] ss:$4 sm:$0x3f]
    %v228 = vsel %vm218, 1, 0
    %v229 = vsel %vm219, 1, 0
    %v230 = vsel %vm220, 1, 0
    %v231 = vsel %vm221, 1, 0
    %v232 = vsel %vm222, 1, 0
    %v233 = vsel %vm223, 1, 0
    %v234 = vsel %vm224, 1, 0
    %v235 = vsel %vm225, 1, 0
    %236 = vset.pattern.permute.xlu0 0
    %237 = vperm.xlu0 %236, %v228
    %v238 = vpop.permute.xlu0 %237
    %239 = vset.pattern.permute.xlu0 0
    %240 = vperm.xlu0 %239, %v229
    %v241 = vpop.permute.xlu0 %240
    %242 = vset.pattern.permute.xlu0 0
    %243 = vperm.xlu0 %242, %v230
    %v244 = vpop.permute.xlu0 %243
    %245 = vset.pattern.permute.xlu0 0
    %246 = vperm.xlu0 %245, %v231
    %v247 = vpop.permute.xlu0 %246
    %248 = vset.pattern.permute.xlu0 0
    %249 = vperm.xlu0 %248, %v232
    %v250 = vpop.permute.xlu0 %249
    %251 = vset.pattern.permute.xlu0 0
    %252 = vperm.xlu0 %251, %v233
    %v253 = vpop.permute.xlu0 %252
    %254 = vset.pattern.permute.xlu0 0
    %255 = vperm.xlu0 %254, %v234
    %v256 = vpop.permute.xlu0 %255
    %257 = vset.pattern.permute.xlu0 0
    %258 = vperm.xlu0 %257, %v235
    %v259 = vpop.permute.xlu0 %258
    %vm260 = vcmp.eq.s32.totalorder %v238, 1
    %vm261 = vcmp.eq.s32.totalorder %v241, 1
    %vm262 = vcmp.eq.s32.totalorder %v244, 1
    %vm263 = vcmp.eq.s32.totalorder %v247, 1
    %vm264 = vcmp.eq.s32.totalorder %v250, 1
    %vm265 = vcmp.eq.s32.totalorder %v253, 1
    %vm266 = vcmp.eq.s32.totalorder %v256, 1
    %vm267 = vcmp.eq.s32.totalorder %v259, 1
    %v269 = vlaneseq
    %v270 = vshrl.u32 %v269, 7
    %v271 = vsub.s32 0, %v270
    %v272 = vrot.slane %v227, %v271
    %v273 = vlaneseq
    %v274 = vshrl.u32 %v273, 7
    %v275 = vsub.s32 1, %v274
    %v276 = vrot.slane %v227, %v275
    %v277 = vlaneseq
    %v278 = vshrl.u32 %v277, 7
    %v279 = vsub.s32 2, %v278
    %v280 = vrot.slane %v227, %v279
    %v281 = vlaneseq
    %v282 = vshrl.u32 %v281, 7
    %v283 = vsub.s32 3, %v282
    %v284 = vrot.slane %v227, %v283
    %v285 = vlaneseq
    %v286 = vshrl.u32 %v285, 7
    %v287 = vsub.s32 4, %v286
    %v288 = vrot.slane %v227, %v287
    %v289 = vlaneseq
    %v290 = vshrl.u32 %v289, 7
    %v291 = vsub.s32 5, %v290
    %v292 = vrot.slane %v227, %v291
    %v299 = vsel %vm260, %v272, %v170
    %v300 = vsel %vm260, %v276, %v171
    %v301 = vsel %vm260, %v280, %v172
    %v302 = vsel %vm260, %v284, %v173
    %v303 = vsel %vm260, %v288, %v174
    %v304 = vsel %vm260, %v292, %v175
    %v305 = vsel %vm261, %v272, %v176
    %v306 = vsel %vm261, %v276, %v177
    %v307 = vsel %vm261, %v280, %v178
    %v308 = vsel %vm261, %v284, %v179
    %v309 = vsel %vm261, %v288, %v180
    %v310 = vsel %vm261, %v292, %v181
    %v311 = vsel %vm262, %v272, %v182
    %v312 = vsel %vm262, %v276, %v183
    %v313 = vsel %vm262, %v280, %v184
    %v314 = vsel %vm262, %v284, %v185
    %v315 = vsel %vm262, %v288, %v186
    %v316 = vsel %vm262, %v292, %v187
    %v317 = vsel %vm263, %v272, %v188
    %v318 = vsel %vm263, %v276, %v189
    %v319 = vsel %vm263, %v280, %v190
    %v320 = vsel %vm263, %v284, %v191
    %v321 = vsel %vm263, %v288, %v192
    %v322 = vsel %vm263, %v292, %v193
    %v323 = vsel %vm264, %v272, %v194
    %v324 = vsel %vm264, %v276, %v195
    %v325 = vsel %vm264, %v280, %v196
    %v326 = vsel %vm264, %v284, %v197
    %v327 = vsel %vm264, %v288, %v198
    %v328 = vsel %vm264, %v292, %v199
    %v329 = vsel %vm265, %v272, %v200
    %v330 = vsel %vm265, %v276, %v201
    %v331 = vsel %vm265, %v280, %v202
    %v332 = vsel %vm265, %v284, %v203
    %v333 = vsel %vm265, %v288, %v204
    %v334 = vsel %vm265, %v292, %v205
    %v335 = vsel %vm266, %v272, %v206
    %v336 = vsel %vm266, %v276, %v207
    %v337 = vsel %vm266, %v280, %v208
    %v338 = vsel %vm266, %v284, %v209
    %v339 = vsel %vm266, %v288, %v210
    %v340 = vsel %vm266, %v292, %v211
    %v341 = vsel %vm267, %v272, %v212
    %v342 = vsel %vm267, %v276, %v213
    %v343 = vsel %vm267, %v280, %v214
    %v344 = vsel %vm267, %v284, %v215
    %v345 = vsel %vm267, %v288, %v216
    %v346 = vsel %vm267, %v292, %v217
    %vm347 = vcmp.eq.s32.totalorder %v40, 0
    %vm348 = vcmp.eq.s32.totalorder %v41, 0
    %vm349 = vcmp.eq.s32.totalorder %v42, 0
    %vm350 = vcmp.eq.s32.totalorder %v43, 0
    %vm351 = vcmp.eq.s32.totalorder %v44, 0
    %vm352 = vcmp.eq.s32.totalorder %v45, 0
    %vm353 = vcmp.eq.s32.totalorder %v46, 0
    %vm354 = vcmp.eq.s32.totalorder %v47, 0
    %v355 = vld [vmem:[%s2] ss:$4 sm:$0x3f]
    %v356 = vsel %vm347, 1, 0
    %v357 = vsel %vm348, 1, 0
    %v358 = vsel %vm349, 1, 0
    %v359 = vsel %vm350, 1, 0
    %v360 = vsel %vm351, 1, 0
    %v361 = vsel %vm352, 1, 0
    %v362 = vsel %vm353, 1, 0
    %v363 = vsel %vm354, 1, 0
    %364 = vset.pattern.permute.xlu0 0
    %365 = vperm.xlu0 %364, %v356
    %v366 = vpop.permute.xlu0 %365
    %367 = vset.pattern.permute.xlu0 0
    %368 = vperm.xlu0 %367, %v357
    %v369 = vpop.permute.xlu0 %368
    %370 = vset.pattern.permute.xlu0 0
    %371 = vperm.xlu0 %370, %v358
    %v372 = vpop.permute.xlu0 %371
    %373 = vset.pattern.permute.xlu0 0
    %374 = vperm.xlu0 %373, %v359
    %v375 = vpop.permute.xlu0 %374
    %376 = vset.pattern.permute.xlu0 0
    %377 = vperm.xlu0 %376, %v360
    %v378 = vpop.permute.xlu0 %377
    %379 = vset.pattern.permute.xlu0 0
    %380 = vperm.xlu0 %379, %v361
    %v381 = vpop.permute.xlu0 %380
    %382 = vset.pattern.permute.xlu0 0
    %383 = vperm.xlu0 %382, %v362
    %v384 = vpop.permute.xlu0 %383
    %385 = vset.pattern.permute.xlu0 0
    %386 = vperm.xlu0 %385, %v363
    %v387 = vpop.permute.xlu0 %386
    %vm388 = vcmp.eq.s32.totalorder %v366, 1
    %vm389 = vcmp.eq.s32.totalorder %v369, 1
    %vm390 = vcmp.eq.s32.totalorder %v372, 1
    %vm391 = vcmp.eq.s32.totalorder %v375, 1
    %vm392 = vcmp.eq.s32.totalorder %v378, 1
    %vm393 = vcmp.eq.s32.totalorder %v381, 1
    %vm394 = vcmp.eq.s32.totalorder %v384, 1
    %vm395 = vcmp.eq.s32.totalorder %v387, 1
    %v397 = vlaneseq
    %v398 = vshrl.u32 %v397, 7
    %v399 = vsub.s32 0, %v398
    %v400 = vrot.slane %v355, %v399
    %v401 = vlaneseq
    %v402 = vshrl.u32 %v401, 7
    %v403 = vsub.s32 1, %v402
    %v404 = vrot.slane %v355, %v403
    %v405 = vlaneseq
    %v406 = vshrl.u32 %v405, 7
    %v407 = vsub.s32 2, %v406
    %v408 = vrot.slane %v355, %v407
    %v409 = vlaneseq
    %v410 = vshrl.u32 %v409, 7
    %v411 = vsub.s32 3, %v410
    %v412 = vrot.slane %v355, %v411
    %v413 = vlaneseq
    %v414 = vshrl.u32 %v413, 7
    %v415 = vsub.s32 4, %v414
    %v416 = vrot.slane %v355, %v415
    %v417 = vlaneseq
    %v418 = vshrl.u32 %v417, 7
    %v419 = vsub.s32 5, %v418
    %v420 = vrot.slane %v355, %v419
    %v427 = vsel %vm388, %v400, %v299
    %v428 = vsel %vm388, %v404, %v300
    %v429 = vsel %vm388, %v408, %v301
    %v430 = vsel %vm388, %v412, %v302
    %v431 = vsel %vm388, %v416, %v303
    %v432 = vsel %vm388, %v420, %v304
    %v433 = vsel %vm389, %v400, %v305
    %v434 = vsel %vm389, %v404, %v306
    %v435 = vsel %vm389, %v408, %v307
    %v436 = vsel %vm389, %v412, %v308
    %v437 = vsel %vm389, %v416, %v309
    %v438 = vsel %vm389, %v420, %v310
    %v439 = vsel %vm390, %v400, %v311
    %v440 = vsel %vm390, %v404, %v312
    %v441 = vsel %vm390, %v408, %v313
    %v442 = vsel %vm390, %v412, %v314
    %v443 = vsel %vm390, %v416, %v315
    %v444 = vsel %vm390, %v420, %v316
    %v445 = vsel %vm391, %v400, %v317
    %v446 = vsel %vm391, %v404, %v318
    %v447 = vsel %vm391, %v408, %v319
    %v448 = vsel %vm391, %v412, %v320
    %v449 = vsel %vm391, %v416, %v321
    %v450 = vsel %vm391, %v420, %v322
    %v451 = vsel %vm392, %v400, %v323
    %v452 = vsel %vm392, %v404, %v324
    %v453 = vsel %vm392, %v408, %v325
    %v454 = vsel %vm392, %v412, %v326
    %v455 = vsel %vm392, %v416, %v327
    %v456 = vsel %vm392, %v420, %v328
    %v457 = vsel %vm393, %v400, %v329
    %v458 = vsel %vm393, %v404, %v330
    %v459 = vsel %vm393, %v408, %v331
    %v460 = vsel %vm393, %v412, %v332
    %v461 = vsel %vm393, %v416, %v333
    %v462 = vsel %vm393, %v420, %v334
    %v463 = vsel %vm394, %v400, %v335
    %v464 = vsel %vm394, %v404, %v336
    %v465 = vsel %vm394, %v408, %v337
    %v466 = vsel %vm394, %v412, %v338
    %v467 = vsel %vm394, %v416, %v339
    %v468 = vsel %vm394, %v420, %v340
    %v469 = vsel %vm395, %v400, %v341
    %v470 = vsel %vm395, %v404, %v342
    %v471 = vsel %vm395, %v408, %v343
    %v472 = vsel %vm395, %v412, %v344
    %v473 = vsel %vm395, %v416, %v345
    %v474 = vsel %vm395, %v420, %v346
    %vm475 = vcmp.eq.s32.totalorder %v48, 0
    %vm476 = vcmp.eq.s32.totalorder %v49, 0
    %vm477 = vcmp.eq.s32.totalorder %v50, 0
    %vm478 = vcmp.eq.s32.totalorder %v51, 0
    %vm479 = vcmp.eq.s32.totalorder %v52, 0
    %vm480 = vcmp.eq.s32.totalorder %v53, 0
    %vm481 = vcmp.eq.s32.totalorder %v54, 0
    %vm482 = vcmp.eq.s32.totalorder %v55, 0
    %v483 = vld [vmem:[%s3] ss:$2 sm:$0x3f]
    %s484 = scalar_lea.vmem %s3, 1
    %v485 = vld [vmem:[%s484] ss:$2 sm:$0x3f]
    %v486 = vsel %vm475, 1, 0
    %v487 = vsel %vm476, 1, 0
    %v488 = vsel %vm477, 1, 0
    %v489 = vsel %vm478, 1, 0
    %v490 = vsel %vm479, 1, 0
    %v491 = vsel %vm480, 1, 0
    %v492 = vsel %vm481, 1, 0
    %v493 = vsel %vm482, 1, 0
    %494 = vset.pattern.permute.xlu0 0
    %495 = vperm.xlu0 %494, %v486
    %v496 = vpop.permute.xlu0 %495
    %497 = vset.pattern.permute.xlu0 0
    %498 = vperm.xlu0 %497, %v487
    %v499 = vpop.permute.xlu0 %498
    %500 = vset.pattern.permute.xlu0 0
    %501 = vperm.xlu0 %500, %v488
    %v502 = vpop.permute.xlu0 %501
    %503 = vset.pattern.permute.xlu0 0
    %504 = vperm.xlu0 %503, %v489
    %v505 = vpop.permute.xlu0 %504
    %506 = vset.pattern.permute.xlu0 0
    %507 = vperm.xlu0 %506, %v490
    %v508 = vpop.permute.xlu0 %507
    %509 = vset.pattern.permute.xlu0 0
    %510 = vperm.xlu0 %509, %v491
    %v511 = vpop.permute.xlu0 %510
    %512 = vset.pattern.permute.xlu0 0
    %513 = vperm.xlu0 %512, %v492
    %v514 = vpop.permute.xlu0 %513
    %515 = vset.pattern.permute.xlu0 0
    %516 = vperm.xlu0 %515, %v493
    %v517 = vpop.permute.xlu0 %516
    %vm518 = vcmp.eq.s32.totalorder %v496, 1
    %vm519 = vcmp.eq.s32.totalorder %v499, 1
    %vm520 = vcmp.eq.s32.totalorder %v502, 1
    %vm521 = vcmp.eq.s32.totalorder %v505, 1
    %vm522 = vcmp.eq.s32.totalorder %v508, 1
    %vm523 = vcmp.eq.s32.totalorder %v511, 1
    %vm524 = vcmp.eq.s32.totalorder %v514, 1
    %vm525 = vcmp.eq.s32.totalorder %v517, 1
    %v527 = vlaneseq
    %v528 = vshrl.u32 %v527, 7
    %v529 = vsub.s32 0, %v528
    %v530 = vrot.slane %v483, %v529
    %v531 = vlaneseq
    %v532 = vshrl.u32 %v531, 7
    %v533 = vsub.s32 1, %v532
    %v534 = vrot.slane %v483, %v533
    %v535 = vlaneseq
    %v536 = vshrl.u32 %v535, 7
    %v537 = vsub.s32 2, %v536
    %v538 = vrot.slane %v483, %v537
    %v539 = vlaneseq
    %v540 = vshrl.u32 %v539, 7
    %v541 = vsub.s32 3, %v540
    %v542 = vrot.slane %v483, %v541
    %v543 = vlaneseq
    %v544 = vshrl.u32 %v543, 7
    %v545 = vsub.s32 4, %v544
    %v546 = vrot.slane %v483, %v545
    %v547 = vlaneseq
    %v548 = vshrl.u32 %v547, 7
    %v549 = vsub.s32 5, %v548
    %v550 = vrot.slane %v483, %v549
    %v558 = vlaneseq
    %v559 = vshrl.u32 %v558, 7
    %v560 = vsub.s32 0, %v559
    %v561 = vrot.slane %v485, %v560
    %v562 = vlaneseq
    %v563 = vshrl.u32 %v562, 7
    %v564 = vsub.s32 1, %v563
    %v565 = vrot.slane %v485, %v564
    %v566 = vlaneseq
    %v567 = vshrl.u32 %v566, 7
    %v568 = vsub.s32 2, %v567
    %v569 = vrot.slane %v485, %v568
    %v570 = vlaneseq
    %v571 = vshrl.u32 %v570, 7
    %v572 = vsub.s32 3, %v571
    %v573 = vrot.slane %v485, %v572
    %v574 = vlaneseq
    %v575 = vshrl.u32 %v574, 7
    %v576 = vsub.s32 4, %v575
    %v577 = vrot.slane %v485, %v576
    %v578 = vlaneseq
    %v579 = vshrl.u32 %v578, 7
    %v580 = vsub.s32 5, %v579
    %v581 = vrot.slane %v485, %v580
    %v588 = vsel %vm518, %v530, %v561
    %v589 = vsel %vm518, %v534, %v565
    %v590 = vsel %vm518, %v538, %v569
    %v591 = vsel %vm518, %v542, %v573
    %v592 = vsel %vm518, %v546, %v577
    %v593 = vsel %vm518, %v550, %v581
    %v594 = vsel %vm519, %v530, %v561
    %v595 = vsel %vm519, %v534, %v565
    %v596 = vsel %vm519, %v538, %v569
    %v597 = vsel %vm519, %v542, %v573
    %v598 = vsel %vm519, %v546, %v577
    %v599 = vsel %vm519, %v550, %v581
    %v600 = vsel %vm520, %v530, %v561
    %v601 = vsel %vm520, %v534, %v565
    %v602 = vsel %vm520, %v538, %v569
    %v603 = vsel %vm520, %v542, %v573
    %v604 = vsel %vm520, %v546, %v577
    %v605 = vsel %vm520, %v550, %v581
    %v606 = vsel %vm521, %v530, %v561
    %v607 = vsel %vm521, %v534, %v565
    %v608 = vsel %vm521, %v538, %v569
    %v609 = vsel %vm521, %v542, %v573
    %v610 = vsel %vm521, %v546, %v577
    %v611 = vsel %vm521, %v550, %v581
    %v612 = vsel %vm522, %v530, %v561
    %v613 = vsel %vm522, %v534, %v565
    %v614 = vsel %vm522, %v538, %v569
    %v615 = vsel %vm522, %v542, %v573
    %v616 = vsel %vm522, %v546, %v577
    %v617 = vsel %vm522, %v550, %v581
    %v618 = vsel %vm523, %v530, %v561
    %v619 = vsel %vm523, %v534, %v565
    %v620 = vsel %vm523, %v538, %v569
    %v621 = vsel %vm523, %v542, %v573
    %v622 = vsel %vm523, %v546, %v577
    %v623 = vsel %vm523, %v550, %v581
    %v624 = vsel %vm524, %v530, %v561
    %v625 = vsel %vm524, %v534, %v565
    %v626 = vsel %vm524, %v538, %v569
    %v627 = vsel %vm524, %v542, %v573
    %v628 = vsel %vm524, %v546, %v577
    %v629 = vsel %vm524, %v550, %v581
    %v630 = vsel %vm525, %v530, %v561
    %v631 = vsel %vm525, %v534, %v565
    %v632 = vsel %vm525, %v538, %v569
    %v633 = vsel %vm525, %v542, %v573
    %v634 = vsel %vm525, %v546, %v577
    %v635 = vsel %vm525, %v550, %v581
    %v636 = vld [vmem:[#allocation2] sm:$0xff]
    %v637 = vld [vmem:[#allocation2 + $0x8] sm:$0xff]
    %v638 = vld [vmem:[#allocation2 + $0x10] sm:$0xff]
    %v639 = vld [vmem:[#allocation2 + $0x18] sm:$0xff]
    %v640 = vld [vmem:[#allocation2 + $0x20] sm:$0xff]
    %v641 = vld [vmem:[#allocation2 + $0x28] sm:$0xff]
    %v642 = vld [vmem:[#allocation2 + $0x30] sm:$0xff]
    %v643 = vld [vmem:[#allocation2 + $0x38] sm:$0xff]
    %v644 = vld [vmem:[#allocation2 + $0x40] sm:$0xff]
    %v645 = vld [vmem:[#allocation2 + $0x48] sm:$0xff]
    %v646 = vld [vmem:[#allocation2 + $0x50] sm:$0xff]
    %v647 = vld [vmem:[#allocation2 + $0x58] sm:$0xff]
    %v648 = vld [vmem:[#allocation2 + $0x60] sm:$0xff]
    %v649 = vld [vmem:[#allocation2 + $0x68] sm:$0xff]
    %v650 = vld [vmem:[#allocation2 + $0x70] sm:$0xff]
    %v651 = vld [vmem:[#allocation2 + $0x78] sm:$0xff]
    %v652 = vld [vmem:[#allocation2 + $0x80] sm:$0xff]
    %v653 = vld [vmem:[#allocation2 + $0x88] sm:$0xff]
    %v654 = vld [vmem:[#allocation2 + $0x90] sm:$0x3f]
    %v655 = vld [vmem:[#allocation2 + $0x98] sm:$0x3f]
    %v656 = vld [vmem:[#allocation2 + $0xa0] sm:$0x3f]
    %v657 = vld [vmem:[#allocation2 + $0xa8] sm:$0x3f]
    %v658 = vld [vmem:[#allocation2 + $0xb0] sm:$0x3f]
    %v659 = vld [vmem:[#allocation2 + $0xb8] sm:$0x3f]
    %v660 = vadd.f32 %v636, %v427
    %v661 = vadd.f32 %v637, %v428
    %v662 = vadd.f32 %v638, %v429
    %v663 = vadd.f32 %v639, %v430
    %v664 = vadd.f32 %v640, %v431
    %v665 = vadd.f32 %v641, %v432
    %v666 = vadd.f32 %v642, %v433
    %v667 = vadd.f32 %v643, %v434
    %v668 = vadd.f32 %v644, %v435
    %v669 = vadd.f32 %v645, %v436
    %v670 = vadd.f32 %v646, %v437
    %v671 = vadd.f32 %v647, %v438
    %v672 = vadd.f32 %v648, %v439
    %v673 = vadd.f32 %v649, %v440
    %v674 = vadd.f32 %v650, %v441
    %v675 = vadd.f32 %v651, %v442
    %v676 = vadd.f32 %v652, %v443
    %v677 = vadd.f32 %v653, %v444
    %v678 = vadd.f32 %v654, %v445
    %v679 = vadd.f32 %v655, %v446
    %v680 = vadd.f32 %v656, %v447
    %v681 = vadd.f32 %v657, %v448
    %v682 = vadd.f32 %v658, %v449
    %v683 = vadd.f32 %v659, %v450
    %v684 = vadd.f32 %v636, %v451
    %v685 = vadd.f32 %v637, %v452
    %v686 = vadd.f32 %v638, %v453
    %v687 = vadd.f32 %v639, %v454
    %v688 = vadd.f32 %v640, %v455
    %v689 = vadd.f32 %v641, %v456
    %v690 = vadd.f32 %v642, %v457
    %v691 = vadd.f32 %v643, %v458
    %v692 = vadd.f32 %v644, %v459
    %v693 = vadd.f32 %v645, %v460
    %v694 = vadd.f32 %v646, %v461
    %v695 = vadd.f32 %v647, %v462
    %v696 = vadd.f32 %v648, %v463
    %v697 = vadd.f32 %v649, %v464
    %v698 = vadd.f32 %v650, %v465
    %v699 = vadd.f32 %v651, %v466
    %v700 = vadd.f32 %v652, %v467
    %v701 = vadd.f32 %v653, %v468
    %v702 = vadd.f32 %v654, %v469
    %v703 = vadd.f32 %v655, %v470
    %v704 = vadd.f32 %v656, %v471
    %v705 = vadd.f32 %v657, %v472
    %v706 = vadd.f32 %v658, %v473
    %v707 = vadd.f32 %v659, %v474
    %v708 = vadd.f32 %v660, %v588
    %v709 = vadd.f32 %v661, %v589
    %v710 = vadd.f32 %v662, %v590
    %v711 = vadd.f32 %v663, %v591
    %v712 = vadd.f32 %v664, %v592
    %v713 = vadd.f32 %v665, %v593
    %v714 = vadd.f32 %v666, %v594
    %v715 = vadd.f32 %v667, %v595
    %v716 = vadd.f32 %v668, %v596
    %v717 = vadd.f32 %v669, %v597
    %v718 = vadd.f32 %v670, %v598
    %v719 = vadd.f32 %v671, %v599
    %v720 = vadd.f32 %v672, %v600
    %v721 = vadd.f32 %v673, %v601
    %v722 = vadd.f32 %v674, %v602
    %v723 = vadd.f32 %v675, %v603
    %v724 = vadd.f32 %v676, %v604
    %v725 = vadd.f32 %v677, %v605
    %v726 = vadd.f32 %v678, %v606
    %v727 = vadd.f32 %v679, %v607
    %v728 = vadd.f32 %v680, %v608
    %v729 = vadd.f32 %v681, %v609
    %v730 = vadd.f32 %v682, %v610
    %v731 = vadd.f32 %v683, %v611
    %v732 = vadd.f32 %v684, %v612
    %v733 = vadd.f32 %v685, %v613
    %v734 = vadd.f32 %v686, %v614
    %v735 = vadd.f32 %v687, %v615
    %v736 = vadd.f32 %v688, %v616
    %v737 = vadd.f32 %v689, %v617
    %v738 = vadd.f32 %v690, %v618
    %v739 = vadd.f32 %v691, %v619
    %v740 = vadd.f32 %v692, %v620
    %v741 = vadd.f32 %v693, %v621
    %v742 = vadd.f32 %v694, %v622
    %v743 = vadd.f32 %v695, %v623
    %v744 = vadd.f32 %v696, %v624
    %v745 = vadd.f32 %v697, %v625
    %v746 = vadd.f32 %v698, %v626
    %v747 = vadd.f32 %v699, %v627
    %v748 = vadd.f32 %v700, %v628
    %v749 = vadd.f32 %v701, %v629
    %v750 = vadd.f32 %v702, %v630
    %v751 = vadd.f32 %v703, %v631
    %v752 = vadd.f32 %v704, %v632
    %v753 = vadd.f32 %v705, %v633
    %v754 = vadd.f32 %v706, %v634
    %v755 = vadd.f32 %v707, %v635
    %v756 = vadd.f32 %v708, %v709
    %v757 = vadd.f32 %v756, %v710
    %v758 = vadd.f32 %v757, %v711
    %v759 = vadd.f32 %v758, %v712
    %v760 = vadd.f32 %v759, %v713
    %761 = vadd.xlane.f32.xlu0 %v760
    %v762 = vpop.xlane.xlu0 %761
    %v763 = vadd.f32 %v714, %v715
    %v764 = vadd.f32 %v763, %v716
    %v765 = vadd.f32 %v764, %v717
    %v766 = vadd.f32 %v765, %v718
    %v767 = vadd.f32 %v766, %v719
    %768 = vadd.xlane.f32.xlu0 %v767
    %v769 = vpop.xlane.xlu0 %768
    %v770 = vadd.f32 %v720, %v721
    %v771 = vadd.f32 %v770, %v722
    %v772 = vadd.f32 %v771, %v723
    %v773 = vadd.f32 %v772, %v724
    %v774 = vadd.f32 %v773, %v725
    %775 = vadd.xlane.f32.xlu0 %v774
    %v776 = vpop.xlane.xlu0 %775
    %vm777 = vcmask 1045504
    %v778 = vsel %vm777, %v726, 0.0
    %v779 = vsel %vm777, %v727, 0.0
    %v780 = vadd.f32 %v778, %v779
    %v781 = vsel %vm777, %v728, 0.0
    %v782 = vadd.f32 %v780, %v781
    %v783 = vsel %vm777, %v729, 0.0
    %v784 = vadd.f32 %v782, %v783
    %v785 = vsel %vm777, %v730, 0.0
    %v786 = vadd.f32 %v784, %v785
    %v787 = vsel %vm777, %v731, 0.0
    %v788 = vadd.f32 %v786, %v787
    %789 = vadd.xlane.f32.xlu0 %v788
    %v790 = vpop.xlane.xlu0 %789
    %v791 = vadd.f32 %v732, %v733
    %v792 = vadd.f32 %v791, %v734
    %v793 = vadd.f32 %v792, %v735
    %v794 = vadd.f32 %v793, %v736
    %v795 = vadd.f32 %v794, %v737
    %796 = vadd.xlane.f32.xlu0 %v795
    %v797 = vpop.xlane.xlu0 %796
    %v798 = vadd.f32 %v738, %v739
    %v799 = vadd.f32 %v798, %v740
    %v800 = vadd.f32 %v799, %v741
    %v801 = vadd.f32 %v800, %v742
    %v802 = vadd.f32 %v801, %v743
    %803 = vadd.xlane.f32.xlu0 %v802
    %v804 = vpop.xlane.xlu0 %803
    %v805 = vadd.f32 %v744, %v745
    %v806 = vadd.f32 %v805, %v746
    %v807 = vadd.f32 %v806, %v747
    %v808 = vadd.f32 %v807, %v748
    %v809 = vadd.f32 %v808, %v749
    %810 = vadd.xlane.f32.xlu0 %v809
    %v811 = vpop.xlane.xlu0 %810
    %v812 = vsel %vm777, %v750, 0.0
    %v813 = vsel %vm777, %v751, 0.0
    %v814 = vadd.f32 %v812, %v813
    %v815 = vsel %vm777, %v752, 0.0
    %v816 = vadd.f32 %v814, %v815
    %v817 = vsel %vm777, %v753, 0.0
    %v818 = vadd.f32 %v816, %v817
    %v819 = vsel %vm777, %v754, 0.0
    %v820 = vadd.f32 %v818, %v819
    %v821 = vsel %vm777, %v755, 0.0
    %v822 = vadd.f32 %v820, %v821
    %823 = vadd.xlane.f32.xlu0 %v822
    %v824 = vpop.xlane.xlu0 %823
    %v825 = vmul.f32 %v708, %v708
    %v826 = vmul.f32 %v709, %v709
    %v827 = vmul.f32 %v710, %v710
    %v828 = vmul.f32 %v711, %v711
    %v829 = vmul.f32 %v712, %v712
    %v830 = vmul.f32 %v713, %v713
    %v831 = vmul.f32 %v714, %v714
    %v832 = vmul.f32 %v715, %v715
    %v833 = vmul.f32 %v716, %v716
    %v834 = vmul.f32 %v717, %v717
    %v835 = vmul.f32 %v718, %v718
    %v836 = vmul.f32 %v719, %v719
    %v837 = vmul.f32 %v720, %v720
    %v838 = vmul.f32 %v721, %v721
    %v839 = vmul.f32 %v722, %v722
    %v840 = vmul.f32 %v723, %v723
    %v841 = vmul.f32 %v724, %v724
    %v842 = vmul.f32 %v725, %v725
    %v843 = vmul.f32 %v726, %v726
    %v844 = vmul.f32 %v727, %v727
    %v845 = vmul.f32 %v728, %v728
    %v846 = vmul.f32 %v729, %v729
    %v847 = vmul.f32 %v730, %v730
    %v848 = vmul.f32 %v731, %v731
    %v849 = vmul.f32 %v732, %v732
    %v850 = vmul.f32 %v733, %v733
    %v851 = vmul.f32 %v734, %v734
    %v852 = vmul.f32 %v735, %v735
    %v853 = vmul.f32 %v736, %v736
    %v854 = vmul.f32 %v737, %v737
    %v855 = vmul.f32 %v738, %v738
    %v856 = vmul.f32 %v739, %v739
    %v857 = vmul.f32 %v740, %v740
    %v858 = vmul.f32 %v741, %v741
    %v859 = vmul.f32 %v742, %v742
    %v860 = vmul.f32 %v743, %v743
    %v861 = vmul.f32 %v744, %v744
    %v862 = vmul.f32 %v745, %v745
    %v863 = vmul.f32 %v746, %v746
    %v864 = vmul.f32 %v747, %v747
    %v865 = vmul.f32 %v748, %v748
    %v866 = vmul.f32 %v749, %v749
    %v867 = vmul.f32 %v750, %v750
    %v868 = vmul.f32 %v751, %v751
    %v869 = vmul.f32 %v752, %v752
    %v870 = vmul.f32 %v753, %v753
    %v871 = vmul.f32 %v754, %v754
    %v872 = vmul.f32 %v755, %v755
    %v873 = vadd.f32 %v825, %v826
    %v874 = vadd.f32 %v873, %v827
    %v875 = vadd.f32 %v874, %v828
    %v876 = vadd.f32 %v875, %v829
    %v877 = vadd.f32 %v876, %v830
    %878 = vadd.xlane.f32.xlu0 %v877
    %v879 = vpop.xlane.xlu0 %878
    %v880 = vadd.f32 %v831, %v832
    %v881 = vadd.f32 %v880, %v833
    %v882 = vadd.f32 %v881, %v834
    %v883 = vadd.f32 %v882, %v835
    %v884 = vadd.f32 %v883, %v836
    %885 = vadd.xlane.f32.xlu0 %v884
    %v886 = vpop.xlane.xlu0 %885
    %v887 = vadd.f32 %v837, %v838
    %v888 = vadd.f32 %v887, %v839
    %v889 = vadd.f32 %v888, %v840
    %v890 = vadd.f32 %v889, %v841
    %v891 = vadd.f32 %v890, %v842
    %892 = vadd.xlane.f32.xlu0 %v891
    %v893 = vpop.xlane.xlu0 %892
    %v894 = vsel %vm777, %v843, 0.0
    %v895 = vsel %vm777, %v844, 0.0
    %v896 = vadd.f32 %v894, %v895
    %v897 = vsel %vm777, %v845, 0.0
    %v898 = vadd.f32 %v896, %v897
    %v899 = vsel %vm777, %v846, 0.0
    %v900 = vadd.f32 %v898, %v899
    %v901 = vsel %vm777, %v847, 0.0
    %v902 = vadd.f32 %v900, %v901
    %v903 = vsel %vm777, %v848, 0.0
    %v904 = vadd.f32 %v902, %v903
    %905 = vadd.xlane.f32.xlu0 %v904
    %v906 = vpop.xlane.xlu0 %905
    %v907 = vadd.f32 %v849, %v850
    %v908 = vadd.f32 %v907, %v851
    %v909 = vadd.f32 %v908, %v852
    %v910 = vadd.f32 %v909, %v853
    %v911 = vadd.f32 %v910, %v854
    %912 = vadd.xlane.f32.xlu0 %v911
    %v913 = vpop.xlane.xlu0 %912
    %v914 = vadd.f32 %v855, %v856
    %v915 = vadd.f32 %v914, %v857
    %v916 = vadd.f32 %v915, %v858
    %v917 = vadd.f32 %v916, %v859
    %v918 = vadd.f32 %v917, %v860
    %919 = vadd.xlane.f32.xlu0 %v918
    %v920 = vpop.xlane.xlu0 %919
    %v921 = vadd.f32 %v861, %v862
    %v922 = vadd.f32 %v921, %v863
    %v923 = vadd.f32 %v922, %v864
    %v924 = vadd.f32 %v923, %v865
    %v925 = vadd.f32 %v924, %v866
    %926 = vadd.xlane.f32.xlu0 %v925
    %v927 = vpop.xlane.xlu0 %926
    %v928 = vsel %vm777, %v867, 0.0
    %v929 = vsel %vm777, %v868, 0.0
    %v930 = vadd.f32 %v928, %v929
    %v931 = vsel %vm777, %v869, 0.0
    %v932 = vadd.f32 %v930, %v931
    %v933 = vsel %vm777, %v870, 0.0
    %v934 = vadd.f32 %v932, %v933
    %v935 = vsel %vm777, %v871, 0.0
    %v936 = vadd.f32 %v934, %v935
    %v937 = vsel %vm777, %v872, 0.0
    %v938 = vadd.f32 %v936, %v937
    %939 = vadd.xlane.f32.xlu0 %v938
    %v940 = vpop.xlane.xlu0 %939
    %v941 = vmul.f32 %v762, 0.0013020834
    %v942 = vmul.f32 %v769, 0.0013020834
    %v943 = vmul.f32 %v776, 0.0013020834
    %v944 = vmul.f32 %v790, 0.0013020834
    %v945 = vmul.f32 %v797, 0.0013020834
    %v946 = vmul.f32 %v804, 0.0013020834
    %v947 = vmul.f32 %v811, 0.0013020834
    %v948 = vmul.f32 %v824, 0.0013020834
    %v949 = vmul.f32 %v879, 0.0013020834
    %v950 = vmul.f32 %v886, 0.0013020834
    %v951 = vmul.f32 %v893, 0.0013020834
    %v952 = vmul.f32 %v906, 0.0013020834
    %v953 = vmul.f32 %v913, 0.0013020834
    %v954 = vmul.f32 %v920, 0.0013020834
    %v955 = vmul.f32 %v927, 0.0013020834
    %v956 = vmul.f32 %v940, 0.0013020834
    %v957 = vmul.f32 %v941, %v941
    %v958 = vmul.f32 %v942, %v942
    %v959 = vmul.f32 %v943, %v943
    %v960 = vmul.f32 %v944, %v944
    %v961 = vmul.f32 %v945, %v945
    %v962 = vmul.f32 %v946, %v946
    %v963 = vmul.f32 %v947, %v947
    %v964 = vmul.f32 %v948, %v948
    %v965 = vsub.f32 %v949, %v957
    %v966 = vsub.f32 %v950, %v958
    %v967 = vsub.f32 %v951, %v959
    %v968 = vsub.f32 %v952, %v960
    %v969 = vsub.f32 %v953, %v961
    %v970 = vsub.f32 %v954, %v962
    %v971 = vsub.f32 %v955, %v963
    %v972 = vsub.f32 %v956, %v964
    %v973 = vadd.f32 %v965, 1e-05
    %v974 = vadd.f32 %v966, 1e-05
    %v975 = vadd.f32 %v967, 1e-05
    %v976 = vadd.f32 %v968, 1e-05
    %v977 = vadd.f32 %v969, 1e-05
    %v978 = vadd.f32 %v970, 1e-05
    %v979 = vadd.f32 %v971, 1e-05
    %v980 = vadd.f32 %v972, 1e-05
    %v981 = vrsqrt.pop %v973
    %v982 = vrsqrt.pop %v974
    %v983 = vrsqrt.pop %v975
    %v984 = vrsqrt.pop %v976
    %v985 = vrsqrt.pop %v977
    %v986 = vrsqrt.pop %v978
    %v987 = vrsqrt.pop %v979
    %v988 = vrsqrt.pop %v980
    %v989 = vsub.f32 %v708, %v941
    %v990 = vsub.f32 %v709, %v941
    %v991 = vsub.f32 %v710, %v941
    %v992 = vsub.f32 %v711, %v941
    %v993 = vsub.f32 %v712, %v941
    %v994 = vsub.f32 %v713, %v941
    %v995 = vsub.f32 %v714, %v942
    %v996 = vsub.f32 %v715, %v942
    %v997 = vsub.f32 %v716, %v942
    %v998 = vsub.f32 %v717, %v942
    %v999 = vsub.f32 %v718, %v942
    %v1000 = vsub.f32 %v719, %v942
    %v1001 = vsub.f32 %v720, %v943
    %v1002 = vsub.f32 %v721, %v943
    %v1003 = vsub.f32 %v722, %v943
    %v1004 = vsub.f32 %v723, %v943
    %v1005 = vsub.f32 %v724, %v943
    %v1006 = vsub.f32 %v725, %v943
    %v1007 = vsub.f32 %v726, %v944
    %v1008 = vsub.f32 %v727, %v944
    %v1009 = vsub.f32 %v728, %v944
    %v1010 = vsub.f32 %v729, %v944
    %v1011 = vsub.f32 %v730, %v944
    %v1012 = vsub.f32 %v731, %v944
    %v1013 = vsub.f32 %v732, %v945
    %v1014 = vsub.f32 %v733, %v945
    %v1015 = vsub.f32 %v734, %v945
    %v1016 = vsub.f32 %v735, %v945
    %v1017 = vsub.f32 %v736, %v945
    %v1018 = vsub.f32 %v737, %v945
    %v1019 = vsub.f32 %v738, %v946
    %v1020 = vsub.f32 %v739, %v946
    %v1021 = vsub.f32 %v740, %v946
    %v1022 = vsub.f32 %v741, %v946
    %v1023 = vsub.f32 %v742, %v946
    %v1024 = vsub.f32 %v743, %v946
    %v1025 = vsub.f32 %v744, %v947
    %v1026 = vsub.f32 %v745, %v947
    %v1027 = vsub.f32 %v746, %v947
    %v1028 = vsub.f32 %v747, %v947
    %v1029 = vsub.f32 %v748, %v947
    %v1030 = vsub.f32 %v749, %v947
    %v1031 = vsub.f32 %v750, %v948
    %v1032 = vsub.f32 %v751, %v948
    %v1033 = vsub.f32 %v752, %v948
    %v1034 = vsub.f32 %v753, %v948
    %v1035 = vsub.f32 %v754, %v948
    %v1036 = vsub.f32 %v755, %v948
    %v1037 = vmul.f32 %v989, %v981
    %v1038 = vmul.f32 %v990, %v981
    %v1039 = vmul.f32 %v991, %v981
    %v1040 = vmul.f32 %v992, %v981
    %v1041 = vmul.f32 %v993, %v981
    %v1042 = vmul.f32 %v994, %v981
    %v1043 = vmul.f32 %v995, %v982
    %v1044 = vmul.f32 %v996, %v982
    %v1045 = vmul.f32 %v997, %v982
    %v1046 = vmul.f32 %v998, %v982
    %v1047 = vmul.f32 %v999, %v982
    %v1048 = vmul.f32 %v1000, %v982
    %v1049 = vmul.f32 %v1001, %v983
    %v1050 = vmul.f32 %v1002, %v983
    %v1051 = vmul.f32 %v1003, %v983
    %v1052 = vmul.f32 %v1004, %v983
    %v1053 = vmul.f32 %v1005, %v983
    %v1054 = vmul.f32 %v1006, %v983
    %v1055 = vmul.f32 %v1007, %v984
    %v1056 = vmul.f32 %v1008, %v984
    %v1057 = vmul.f32 %v1009, %v984
    %v1058 = vmul.f32 %v1010, %v984
    %v1059 = vmul.f32 %v1011, %v984
    %v1060 = vmul.f32 %v1012, %v984
    %v1061 = vmul.f32 %v1013, %v985
    %v1062 = vmul.f32 %v1014, %v985
    %v1063 = vmul.f32 %v1015, %v985
    %v1064 = vmul.f32 %v1016, %v985
    %v1065 = vmul.f32 %v1017, %v985
    %v1066 = vmul.f32 %v1018, %v985
    %v1067 = vmul.f32 %v1019, %v986
    %v1068 = vmul.f32 %v1020, %v986
    %v1069 = vmul.f32 %v1021, %v986
    %v1070 = vmul.f32 %v1022, %v986
    %v1071 = vmul.f32 %v1023, %v986
    %v1072 = vmul.f32 %v1024, %v986
    %v1073 = vmul.f32 %v1025, %v987
    %v1074 = vmul.f32 %v1026, %v987
    %v1075 = vmul.f32 %v1027, %v987
    %v1076 = vmul.f32 %v1028, %v987
    %v1077 = vmul.f32 %v1029, %v987
    %v1078 = vmul.f32 %v1030, %v987
    %v1079 = vmul.f32 %v1031, %v988
    %v1080 = vmul.f32 %v1032, %v988
    %v1081 = vmul.f32 %v1033, %v988
    %v1082 = vmul.f32 %v1034, %v988
    %v1083 = vmul.f32 %v1035, %v988
    %v1084 = vmul.f32 %v1036, %v988
    %v1085 = vld [vmem:[%s5] sm:$0x3f]
    %v1087 = vlaneseq
    %v1088 = vshrl.u32 %v1087, 7
    %v1089 = vsub.s32 0, %v1088
    %v1090 = vrot.slane %v1085, %v1089
    %v1091 = vlaneseq
    %v1092 = vshrl.u32 %v1091, 7
    %v1093 = vsub.s32 1, %v1092
    %v1094 = vrot.slane %v1085, %v1093
    %v1095 = vlaneseq
    %v1096 = vshrl.u32 %v1095, 7
    %v1097 = vsub.s32 2, %v1096
    %v1098 = vrot.slane %v1085, %v1097
    %v1099 = vlaneseq
    %v1100 = vshrl.u32 %v1099, 7
    %v1101 = vsub.s32 3, %v1100
    %v1102 = vrot.slane %v1085, %v1101
    %v1103 = vlaneseq
    %v1104 = vshrl.u32 %v1103, 7
    %v1105 = vsub.s32 4, %v1104
    %v1106 = vrot.slane %v1085, %v1105
    %v1107 = vlaneseq
    %v1108 = vshrl.u32 %v1107, 7
    %v1109 = vsub.s32 5, %v1108
    %v1110 = vrot.slane %v1085, %v1109
    %v1117 = vmul.f32 %v1037, %v1090
    %v1118 = vmul.f32 %v1038, %v1094
    %v1119 = vmul.f32 %v1039, %v1098
    %v1120 = vmul.f32 %v1040, %v1102
    %v1121 = vmul.f32 %v1041, %v1106
    %v1122 = vmul.f32 %v1042, %v1110
    %v1123 = vmul.f32 %v1043, %v1090
    %v1124 = vmul.f32 %v1044, %v1094
    %v1125 = vmul.f32 %v1045, %v1098
    %v1126 = vmul.f32 %v1046, %v1102
    %v1127 = vmul.f32 %v1047, %v1106
    %v1128 = vmul.f32 %v1048, %v1110
    %v1129 = vmul.f32 %v1049, %v1090
    %v1130 = vmul.f32 %v1050, %v1094
    %v1131 = vmul.f32 %v1051, %v1098
    %v1132 = vmul.f32 %v1052, %v1102
    %v1133 = vmul.f32 %v1053, %v1106
    %v1134 = vmul.f32 %v1054, %v1110
    %v1135 = vmul.f32 %v1055, %v1090
    %v1136 = vmul.f32 %v1056, %v1094
    %v1137 = vmul.f32 %v1057, %v1098
    %v1138 = vmul.f32 %v1058, %v1102
    %v1139 = vmul.f32 %v1059, %v1106
    %v1140 = vmul.f32 %v1060, %v1110
    %v1141 = vmul.f32 %v1061, %v1090
    %v1142 = vmul.f32 %v1062, %v1094
    %v1143 = vmul.f32 %v1063, %v1098
    %v1144 = vmul.f32 %v1064, %v1102
    %v1145 = vmul.f32 %v1065, %v1106
    %v1146 = vmul.f32 %v1066, %v1110
    %v1147 = vmul.f32 %v1067, %v1090
    %v1148 = vmul.f32 %v1068, %v1094
    %v1149 = vmul.f32 %v1069, %v1098
    %v1150 = vmul.f32 %v1070, %v1102
    %v1151 = vmul.f32 %v1071, %v1106
    %v1152 = vmul.f32 %v1072, %v1110
    %v1153 = vmul.f32 %v1073, %v1090
    %v1154 = vmul.f32 %v1074, %v1094
    %v1155 = vmul.f32 %v1075, %v1098
    %v1156 = vmul.f32 %v1076, %v1102
    %v1157 = vmul.f32 %v1077, %v1106
    %v1158 = vmul.f32 %v1078, %v1110
    %v1159 = vmul.f32 %v1079, %v1090
    %v1160 = vmul.f32 %v1080, %v1094
    %v1161 = vmul.f32 %v1081, %v1098
    %v1162 = vmul.f32 %v1082, %v1102
    %v1163 = vmul.f32 %v1083, %v1106
    %v1164 = vmul.f32 %v1084, %v1110
    %v1165 = vld [vmem:[%s6] sm:$0x3f]
    %v1167 = vlaneseq
    %v1168 = vshrl.u32 %v1167, 7
    %v1169 = vsub.s32 0, %v1168
    %v1170 = vrot.slane %v1165, %v1169
    %v1171 = vlaneseq
    %v1172 = vshrl.u32 %v1171, 7
    %v1173 = vsub.s32 1, %v1172
    %v1174 = vrot.slane %v1165, %v1173
    %v1175 = vlaneseq
    %v1176 = vshrl.u32 %v1175, 7
    %v1177 = vsub.s32 2, %v1176
    %v1178 = vrot.slane %v1165, %v1177
    %v1179 = vlaneseq
    %v1180 = vshrl.u32 %v1179, 7
    %v1181 = vsub.s32 3, %v1180
    %v1182 = vrot.slane %v1165, %v1181
    %v1183 = vlaneseq
    %v1184 = vshrl.u32 %v1183, 7
    %v1185 = vsub.s32 4, %v1184
    %v1186 = vrot.slane %v1165, %v1185
    %v1187 = vlaneseq
    %v1188 = vshrl.u32 %v1187, 7
    %v1189 = vsub.s32 5, %v1188
    %v1190 = vrot.slane %v1165, %v1189
    %v1197 = vadd.f32 %v1117, %v1170
    %v1198 = vadd.f32 %v1118, %v1174
    %v1199 = vadd.f32 %v1119, %v1178
    %v1200 = vadd.f32 %v1120, %v1182
    %v1201 = vadd.f32 %v1121, %v1186
    %v1202 = vadd.f32 %v1122, %v1190
    %v1203 = vadd.f32 %v1123, %v1170
    %v1204 = vadd.f32 %v1124, %v1174
    %v1205 = vadd.f32 %v1125, %v1178
    %v1206 = vadd.f32 %v1126, %v1182
    %v1207 = vadd.f32 %v1127, %v1186
    %v1208 = vadd.f32 %v1128, %v1190
    %v1209 = vadd.f32 %v1129, %v1170
    %v1210 = vadd.f32 %v1130, %v1174
    %v1211 = vadd.f32 %v1131, %v1178
    %v1212 = vadd.f32 %v1132, %v1182
    %v1213 = vadd.f32 %v1133, %v1186
    %v1214 = vadd.f32 %v1134, %v1190
    %v1215 = vadd.f32 %v1135, %v1170
    %v1216 = vadd.f32 %v1136, %v1174
    %v1217 = vadd.f32 %v1137, %v1178
    %v1218 = vadd.f32 %v1138, %v1182
    %v1219 = vadd.f32 %v1139, %v1186
    %v1220 = vadd.f32 %v1140, %v1190
    %v1221 = vadd.f32 %v1141, %v1170
    %v1222 = vadd.f32 %v1142, %v1174
    %v1223 = vadd.f32 %v1143, %v1178
    %v1224 = vadd.f32 %v1144, %v1182
    %v1225 = vadd.f32 %v1145, %v1186
    %v1226 = vadd.f32 %v1146, %v1190
    %v1227 = vadd.f32 %v1147, %v1170
    %v1228 = vadd.f32 %v1148, %v1174
    %v1229 = vadd.f32 %v1149, %v1178
    %v1230 = vadd.f32 %v1150, %v1182
    %v1231 = vadd.f32 %v1151, %v1186
    %v1232 = vadd.f32 %v1152, %v1190
    %v1233 = vadd.f32 %v1153, %v1170
    %v1234 = vadd.f32 %v1154, %v1174
    %v1235 = vadd.f32 %v1155, %v1178
    %v1236 = vadd.f32 %v1156, %v1182
    %v1237 = vadd.f32 %v1157, %v1186
    %v1238 = vadd.f32 %v1158, %v1190
    %v1239 = vadd.f32 %v1159, %v1170
    %v1240 = vadd.f32 %v1160, %v1174
    %v1241 = vadd.f32 %v1161, %v1178
    %v1242 = vadd.f32 %v1162, %v1182
    %v1243 = vadd.f32 %v1163, %v1186
    %v1244 = vadd.f32 %v1164, %v1190
    %1245 = vst [vmem:[%s7] sm:$0xff] %v1197
    %1246 = vst [vmem:[%s7 + $0x8] sm:$0xff] %v1198
    %1247 = vst [vmem:[%s7 + $0x10] sm:$0xff] %v1199
    %1248 = vst [vmem:[%s7 + $0x18] sm:$0xff] %v1200
    %1249 = vst [vmem:[%s7 + $0x20] sm:$0xff] %v1201
    %1250 = vst [vmem:[%s7 + $0x28] sm:$0xff] %v1202
    %1251 = vst [vmem:[%s7 + $0x30] sm:$0xff] %v1203
    %1252 = vst [vmem:[%s7 + $0x38] sm:$0xff] %v1204
    %1253 = vst [vmem:[%s7 + $0x40] sm:$0xff] %v1205
    %1254 = vst [vmem:[%s7 + $0x48] sm:$0xff] %v1206
    %1255 = vst [vmem:[%s7 + $0x50] sm:$0xff] %v1207
    %1256 = vst [vmem:[%s7 + $0x58] sm:$0xff] %v1208
    %1257 = vst [vmem:[%s7 + $0x60] sm:$0xff] %v1209
    %1258 = vst [vmem:[%s7 + $0x68] sm:$0xff] %v1210
    %1259 = vst [vmem:[%s7 + $0x70] sm:$0xff] %v1211
    %1260 = vst [vmem:[%s7 + $0x78] sm:$0xff] %v1212
    %1261 = vst [vmem:[%s7 + $0x80] sm:$0xff] %v1213
    %1262 = vst [vmem:[%s7 + $0x88] sm:$0xff] %v1214
    %1263 = vst [vmem:[%s7 + $0x90] sm:$0x3f] %v1215
    %1264 = vst [vmem:[%s7 + $0x98] sm:$0x3f] %v1216
    %1265 = vst [vmem:[%s7 + $0xa0] sm:$0x3f] %v1217
    %1266 = vst [vmem:[%s7 + $0xa8] sm:$0x3f] %v1218
    %1267 = vst [vmem:[%s7 + $0xb0] sm:$0x3f] %v1219
    %1268 = vst [vmem:[%s7 + $0xb8] sm:$0x3f] %v1220
    %1269 = vst [vmem:[%s7 + $0xc0] sm:$0xff] %v1221
    %1270 = vst [vmem:[%s7 + $0xc8] sm:$0xff] %v1222
    %1271 = vst [vmem:[%s7 + $0xd0] sm:$0xff] %v1223
    %1272 = vst [vmem:[%s7 + $0xd8] sm:$0xff] %v1224
    %1273 = vst [vmem:[%s7 + $0xe0] sm:$0xff] %v1225
    %1274 = vst [vmem:[%s7 + $0xe8] sm:$0xff] %v1226
    %1275 = vst [vmem:[%s7 + $0xf0] sm:$0xff] %v1227
    %1276 = vst [vmem:[%s7 + $0xf8] sm:$0xff] %v1228
    %1277 = vst [vmem:[%s7 + $0x100] sm:$0xff] %v1229
    %1278 = vst [vmem:[%s7 + $0x108] sm:$0xff] %v1230
    %1279 = vst [vmem:[%s7 + $0x110] sm:$0xff] %v1231
    %1280 = vst [vmem:[%s7 + $0x118] sm:$0xff] %v1232
    %1281 = vst [vmem:[%s7 + $0x120] sm:$0xff] %v1233
    %1282 = vst [vmem:[%s7 + $0x128] sm:$0xff] %v1234
    %1283 = vst [vmem:[%s7 + $0x130] sm:$0xff] %v1235
    %1284 = vst [vmem:[%s7 + $0x138] sm:$0xff] %v1236
    %1285 = vst [vmem:[%s7 + $0x140] sm:$0xff] %v1237
    %1286 = vst [vmem:[%s7 + $0x148] sm:$0xff] %v1238
    %1287 = vst [vmem:[%s7 + $0x150] sm:$0x3f] %v1239
    %1288 = vst [vmem:[%s7 + $0x158] sm:$0x3f] %v1240
    %1289 = vst [vmem:[%s7 + $0x160] sm:$0x3f] %v1241
    %1290 = vst [vmem:[%s7 + $0x168] sm:$0x3f] %v1242
    %1291 = vst [vmem:[%s7 + $0x170] sm:$0x3f] %v1243
    %1292 = vst [vmem:[%s7 + $0x178] sm:$0x3f] %v1244
    // Predicated region
    $region34: #{tpu_custom_call.1} parent=1 // pred_check
      _
    $region35: #{tpu_custom_call.1} parent=1 // pred_check_branch
      %1294 = sbr.rel (0) target = $region37
    $region36: #{tpu_custom_call.1} parent=1 // pred_region
      _
    $region37: #{tpu_custom_call.1} parent=1 // pred_fallthru
      _
    // Predicated region
    $region38: #{tpu_custom_call.1} parent=1 // pred_check
      _
    $region39: #{tpu_custom_call.1} parent=1 // pred_check_branch
      %1296 = sbr.rel (0) target = $region41
    $region40: #{tpu_custom_call.1} parent=1 // pred_region
      _
    $region41: #{tpu_custom_call.1} parent=1 // pred_fallthru
      _
    %1297 = vsyncpa [#allocation3], 1

</llo_original>
